<compile_context>
chip_gen: v6e
topology: v6e:2x2x1
jax: 0.10.0
libtpu: 0.0.40
codegen_flags: <defaults>
</compile_context>

<pallas_src>
import jax
import jax.numpy as jnp
from jax.experimental import pallas as pl
from jax.experimental.pallas import tpu as pltpu


def _make_si_snr_kernel(length: int, tl: int, need_mask: bool):
    """Build the row-tiled, time-accumulating SI-SNR kernel."""
    eps = float(jnp.finfo(jnp.float32).eps)  # torch.finfo(float32).eps
    inv_l = 1.0 / float(length)

    def kernel(pred_ref, tgt_ref, out_ref,
               sp_ref, st_ref, spp_ref, stt_ref, spt_ref):
        k = pl.program_id(1)

        @pl.when(k == 0)
        def _init():
            sp_ref[...] = jnp.zeros_like(sp_ref)
            st_ref[...] = jnp.zeros_like(st_ref)
            spp_ref[...] = jnp.zeros_like(spp_ref)
            stt_ref[...] = jnp.zeros_like(stt_ref)
            spt_ref[...] = jnp.zeros_like(spt_ref)

        p = pred_ref[...].astype(jnp.float32)   # (TR, TL)
        t = tgt_ref[...].astype(jnp.float32)    # (TR, TL)

        if need_mask:
            # Ragged last time chunk: out-of-bounds lanes hold unspecified
            # data; zero them so they never enter the sums.
            start = k * tl
            lane = jax.lax.broadcasted_iota(jnp.int32, p.shape, dimension=1)
            valid = (start + lane) < length
            p = jnp.where(valid, p, jnp.float32(0.0))
            t = jnp.where(valid, t, jnp.float32(0.0))

        # Uncentered per-row sufficient statistics, accumulated over k.
        sp_ref[...] += jnp.sum(p, axis=-1, keepdims=True)
        st_ref[...] += jnp.sum(t, axis=-1, keepdims=True)
        spp_ref[...] += jnp.sum(p * p, axis=-1, keepdims=True)
        stt_ref[...] += jnp.sum(t * t, axis=-1, keepdims=True)
        spt_ref[...] += jnp.sum(p * t, axis=-1, keepdims=True)

        @pl.when(k == pl.num_programs(1) - 1)
        def _finalize():
            sp = sp_ref[...]
            st = st_ref[...]
            # Zero-mean (centered) sums from uncentered ones (scalars per row).
            s_pt = spt_ref[...] - sp * st * inv_l
            s_tt = stt_ref[...] - st * st * inv_l
            s_pp = spp_ref[...] - sp * sp * inv_l

            alpha = (s_pt + eps) / (s_tt + eps)
            e_ts = alpha * alpha * s_tt                                    # ||alpha*tc||^2
            e_noise = jnp.maximum(s_pp - 2.0 * alpha * s_pt + e_ts, 0.0)   # ||alpha*tc - pc||^2
            val = (e_ts + eps) / (e_noise + eps)
            out_ref[...] = 10.0 * jnp.log10(val)   # (TR, 1) per-row SI-SNR in dB

    return kernel


def _vmem_capacity_bytes() -> int:
    try:
        return int(pltpu.get_tpu_info().vmem_capacity_bytes)
    except Exception:
        return 64 << 20  # conservative (v7x-sized) fallback


def _choose_tiles(n_rows: int, length: int, itemsize: int, target_block_bytes: int,
                  max_tile_rows=None, max_time_chunk=None):
    """Pick (TR rows, TL time) for one input block.

    TR: multiple of 8, capped at 64, >=2 row tiles when n_rows allows (v7x
    megacore).  TL: multiple of 128 (or the full length) sized so one input
    block is ~target_block_bytes; the last chunk may be ragged (masked).
    """
    n_pad8 = ((n_rows + 7) // 8) * 8
    tr = min(n_pad8, 64)
    if n_pad8 >= 16:
        tr = min(tr, ((n_pad8 // 2 + 7) // 8) * 8)   # >= 2 row tiles
    if max_tile_rows is not None:
        tr = max(8, min(tr, (max_tile_rows // 8) * 8))

    tl_cap = max(128, (target_block_bytes // max(1, tr * itemsize)) // 128 * 128)
    if max_time_chunk is not None:
        tl_cap = max(128, min(tl_cap, (max_time_chunk // 128) * 128))
    tl = length if tl_cap >= length else tl_cap
    return tr, tl


def tss_si_snr_loss(output_audio: jax.Array, s1: jax.Array, *,
                    max_tile_rows=None, max_time_chunk=None) -> dict:
    """Pallas equivalent of TSSSiSNRLoss.forward.

    Args:
      output_audio: predicted separated signals, shape (num_spks, B, L)
      s1:           reference signals,            shape (num_spks, B, L)
    Returns:
      {'loss': scalar}  where loss = -mean(SI-SNR(output_audio, s1))
    """
    assert output_audio.shape == s1.shape
    num_spks, batch, length = output_audio.shape
    n_rows = num_spks * batch

    pred2d = output_audio.reshape(n_rows, length)
    tgt2d = s1.reshape(n_rows, length)
    itemsize = jnp.dtype(output_audio.dtype).itemsize

    # Generation-aware budgets: 128-MiB-VMEM parts (v5e/v6e) vs 64 MiB (v7x).
    vmem_cap = _vmem_capacity_bytes()
    if vmem_cap >= (96 << 20):
        target_block_bytes, vmem_limit = 4 << 20, 64 << 20
    else:
        target_block_bytes, vmem_limit = 2 << 20, 40 << 20

    tr, tl = _choose_tiles(n_rows, length, itemsize, target_block_bytes,
                           max_tile_rows=max_tile_rows, max_time_chunk=max_time_chunk)
    grid = (pl.cdiv(n_rows, tr), pl.cdiv(length, tl))
    need_mask = (length % tl) != 0

    cost = pl.CostEstimate(
        flops=10 * n_rows * length,
        transcendentals=n_rows,
        bytes_accessed=2 * n_rows * length * itemsize + n_rows * 4,
    )

    si_snr_rows = pl.pallas_call(
        _make_si_snr_kernel(length, tl, need_mask),
        out_shape=jax.ShapeDtypeStruct((n_rows, 1), jnp.float32),
        grid=grid,
        in_specs=[
            pl.BlockSpec((tr, tl), lambda i, k: (i, k)),
            pl.BlockSpec((tr, tl), lambda i, k: (i, k)),
        ],
        out_specs=pl.BlockSpec((tr, 1), lambda i, k: (i, 0)),
        scratch_shapes=[pltpu.VMEM((tr, 1), jnp.float32)] * 5,
        compiler_params=pltpu.CompilerParams(
            dimension_semantics=("parallel", "arbitrary"),
            vmem_limit_bytes=vmem_limit,
        ),
        cost_estimate=cost,
    )(pred2d, tgt2d)

    # Final negated mean over the N per-row SI-SNR scalars: trivial JAX
    # reduction in the wrapper (keeps the row grid axis fully parallel).
    loss = -jnp.mean(si_snr_rows[:, 0])
    return {"loss": loss}


def _reference_loss(output_audio, s1):
    """Pure-JAX reference mirroring torchmetrics SI-SNR (zero_mean=True)."""
    eps = jnp.float32(jnp.finfo(jnp.float32).eps)
    p = output_audio.astype(jnp.float32)
    t = s1.astype(jnp.float32)
    p = p - jnp.mean(p, axis=-1, keepdims=True)
    t = t - jnp.mean(t, axis=-1, keepdims=True)
    alpha = (jnp.sum(p * t, -1, keepdims=True) + eps) / (
        jnp.sum(t * t, -1, keepdims=True) + eps
    )
    ts = alpha * t
    noise = ts - p
    val = (jnp.sum(ts * ts, -1) + eps) / (jnp.sum(noise * noise, -1) + eps)
    return -jnp.mean(10.0 * jnp.log10(val))


if __name__ == "__main__":
    # Small deterministic inputs: num_spks=2, batch=5, seq length L=500.
    key = jax.random.PRNGKey(0)
    k1, k2 = jax.random.split(key)
    num_spks, batch, length = 2, 5, 500

    s1 = jax.random.normal(k1, (num_spks, batch, length), dtype=jnp.float32)
    # prediction = reference + noise, so SI-SNR is finite and meaningful
    output_audio = s1 + 0.3 * jax.random.normal(
        k2, (num_spks, batch, length), dtype=jnp.float32
    )

    ref = _reference_loss(output_audio, s1)

    # Default tiling: n_rows=10 -> TR=8 (2 row tiles, ragged edge rows dropped),
    # full L in one time chunk.
    loss = jax.block_until_ready(tss_si_snr_loss(output_audio, s1)["loss"])
    assert jnp.allclose(loss, ref, rtol=1e-3, atol=1e-3), (loss, ref)

    # Force the time-accumulation path: TL=128 chunks (4 chunks, ragged last
    # chunk masked in-kernel) + 2-step ragged row grid.
    loss_chunked = jax.block_until_ready(
        tss_si_snr_loss(output_audio, s1, max_tile_rows=8, max_time_chunk=128)["loss"]
    )
    assert jnp.allclose(loss_chunked, ref, rtol=1e-3, atol=1e-3), (loss_chunked, ref)

    # bf16 inputs accepted end-to-end (accumulation is f32 inside the kernel).
    loss_bf16 = jax.block_until_ready(
        tss_si_snr_loss(output_audio.astype(jnp.bfloat16),
                        s1.astype(jnp.bfloat16))["loss"]
    )
    assert bool(jnp.isfinite(loss_bf16)), loss_bf16

    print("KERNEL_OK")
</pallas_src>

<mosaic_0001>
module attributes {stable_mosaic.version = 11 : i64} {
  func.func @kernel(%arg0: i32, %arg1: i32, %arg2: memref<8x500xf32, #tpu.memory_space<vmem>>, %arg3: memref<8x500xf32, #tpu.memory_space<vmem>>, %arg4: memref<8x1xf32, #tpu.memory_space<vmem>>, %arg5: memref<8x1xf32, #tpu.memory_space<vmem>>, %arg6: memref<8x1xf32, #tpu.memory_space<vmem>>, %arg7: memref<8x1xf32, #tpu.memory_space<vmem>>, %arg8: memref<8x1xf32, #tpu.memory_space<vmem>>, %arg9: memref<8x1xf32, #tpu.memory_space<vmem>>) attributes {dimension_semantics = [#tpu.dimension_semantics<parallel>, #tpu.dimension_semantics<arbitrary>], iteration_bounds = array<i64: 2, 1>, scalar_prefetch = 0 : i64, scratch_operands = 5 : i64, tpu.core_type = #tpu.core_type<tc>, window_params = [{transform_indices = @transform_0, window_bounds = array<i64: 8, 500>}, {transform_indices = @transform_1, window_bounds = array<i64: 8, 500>}, {transform_indices = @transform_2, window_bounds = array<i64: 8, 1>}]} {
    %c0_i32 = arith.constant 0 : i32
    %0 = arith.cmpi eq, %arg1, %c0_i32 : i32
    %1 = arith.extui %0 : i1 to i32
    %c0_i32_0 = arith.constant 0 : i32
    %2 = arith.cmpi ne, %1, %c0_i32_0 : i32
    scf.if %2 {
      %cst_30 = arith.constant 0.000000e+00 : f32
      %36 = vector.broadcast %cst_30 : f32 to vector<8x1xf32>
      %c0_31 = arith.constant 0 : index
      %c0_32 = arith.constant 0 : index
      %37 = vector.load %arg5[%c0_31, %c0_32] : memref<8x1xf32, #tpu.memory_space<vmem>>, vector<8x1xf32>
      tpu.vector_store %arg5[%c0_31, %c0_32], %36 {strides = array<i32>} : memref<8x1xf32, #tpu.memory_space<vmem>>, vector<8x1xf32>,
      %cst_33 = arith.constant 0.000000e+00 : f32
      %38 = vector.broadcast %cst_33 : f32 to vector<8x1xf32>
      %c0_34 = arith.constant 0 : index
      %c0_35 = arith.constant 0 : index
      %39 = vector.load %arg6[%c0_34, %c0_35] : memref<8x1xf32, #tpu.memory_space<vmem>>, vector<8x1xf32>
      tpu.vector_store %arg6[%c0_34, %c0_35], %38 {strides = array<i32>} : memref<8x1xf32, #tpu.memory_space<vmem>>, vector<8x1xf32>,
      %cst_36 = arith.constant 0.000000e+00 : f32
      %40 = vector.broadcast %cst_36 : f32 to vector<8x1xf32>
      %c0_37 = arith.constant 0 : index
      %c0_38 = arith.constant 0 : index
      %41 = vector.load %arg7[%c0_37, %c0_38] : memref<8x1xf32, #tpu.memory_space<vmem>>, vector<8x1xf32>
      tpu.vector_store %arg7[%c0_37, %c0_38], %40 {strides = array<i32>} : memref<8x1xf32, #tpu.memory_space<vmem>>, vector<8x1xf32>,
      %cst_39 = arith.constant 0.000000e+00 : f32
      %42 = vector.broadcast %cst_39 : f32 to vector<8x1xf32>
      %c0_40 = arith.constant 0 : index
      %c0_41 = arith.constant 0 : index
      %43 = vector.load %arg8[%c0_40, %c0_41] : memref<8x1xf32, #tpu.memory_space<vmem>>, vector<8x1xf32>
      tpu.vector_store %arg8[%c0_40, %c0_41], %42 {strides = array<i32>} : memref<8x1xf32, #tpu.memory_space<vmem>>, vector<8x1xf32>,
      %cst_42 = arith.constant 0.000000e+00 : f32
      %44 = vector.broadcast %cst_42 : f32 to vector<8x1xf32>
      %c0_43 = arith.constant 0 : index
      %c0_44 = arith.constant 0 : index
      %45 = vector.load %arg9[%c0_43, %c0_44] : memref<8x1xf32, #tpu.memory_space<vmem>>, vector<8x1xf32>
      tpu.vector_store %arg9[%c0_43, %c0_44], %44 {strides = array<i32>} : memref<8x1xf32, #tpu.memory_space<vmem>>, vector<8x1xf32>,
    } else {
    }
    %c0 = arith.constant 0 : index
    %c0_1 = arith.constant 0 : index
    %3 = vector.load %arg2[%c0, %c0_1] : memref<8x500xf32, #tpu.memory_space<vmem>>, vector<8x500xf32>
    %c0_2 = arith.constant 0 : index
    %c0_3 = arith.constant 0 : index
    %4 = vector.load %arg3[%c0_2, %c0_3] : memref<8x500xf32, #tpu.memory_space<vmem>>, vector<8x500xf32>
    %c0_4 = arith.constant 0 : index
    %c0_5 = arith.constant 0 : index
    %5 = vector.load %arg5[%c0_4, %c0_5] : memref<8x1xf32, #tpu.memory_space<vmem>>, vector<8x1xf32>
    %cst = arith.constant dense<0.000000e+00> : vector<8xf32>
    %6 = vector.multi_reduction <add>, %3, %cst [1] : vector<8x500xf32> to vector<8xf32>
    %7 = vector.shape_cast %6 : vector<8xf32> to vector<8x1xf32>
    %8 = arith.addf %5, %7 : vector<8x1xf32>
    %c0_6 = arith.constant 0 : index
    %c0_7 = arith.constant 0 : index
    %9 = vector.load %arg5[%c0_6, %c0_7] : memref<8x1xf32, #tpu.memory_space<vmem>>, vector<8x1xf32>
    tpu.vector_store %arg5[%c0_6, %c0_7], %8 {strides = array<i32>} : memref<8x1xf32, #tpu.memory_space<vmem>>, vector<8x1xf32>,
    %c0_8 = arith.constant 0 : index
    %c0_9 = arith.constant 0 : index
    %10 = vector.load %arg6[%c0_8, %c0_9] : memref<8x1xf32, #tpu.memory_space<vmem>>, vector<8x1xf32>
    %cst_10 = arith.constant dense<0.000000e+00> : vector<8xf32>
    %11 = vector.multi_reduction <add>, %4, %cst_10 [1] : vector<8x500xf32> to vector<8xf32>
    %12 = vector.shape_cast %11 : vector<8xf32> to vector<8x1xf32>
    %13 = arith.addf %10, %12 : vector<8x1xf32>
    %c0_11 = arith.constant 0 : index
    %c0_12 = arith.constant 0 : index
    %14 = vector.load %arg6[%c0_11, %c0_12] : memref<8x1xf32, #tpu.memory_space<vmem>>, vector<8x1xf32>
    tpu.vector_store %arg6[%c0_11, %c0_12], %13 {strides = array<i32>} : memref<8x1xf32, #tpu.memory_space<vmem>>, vector<8x1xf32>,
    %c0_13 = arith.constant 0 : index
    %c0_14 = arith.constant 0 : index
    %15 = vector.load %arg7[%c0_13, %c0_14] : memref<8x1xf32, #tpu.memory_space<vmem>>, vector<8x1xf32>
    %16 = arith.mulf %3, %3 : vector<8x500xf32>
    %cst_15 = arith.constant dense<0.000000e+00> : vector<8xf32>
    %17 = vector.multi_reduction <add>, %16, %cst_15 [1] : vector<8x500xf32> to vector<8xf32>
    %18 = vector.shape_cast %17 : vector<8xf32> to vector<8x1xf32>
    %19 = arith.addf %15, %18 : vector<8x1xf32>
    %c0_16 = arith.constant 0 : index
    %c0_17 = arith.constant 0 : index
    %20 = vector.load %arg7[%c0_16, %c0_17] : memref<8x1xf32, #tpu.memory_space<vmem>>, vector<8x1xf32>
    tpu.vector_store %arg7[%c0_16, %c0_17], %19 {strides = array<i32>} : memref<8x1xf32, #tpu.memory_space<vmem>>, vector<8x1xf32>,
    %c0_18 = arith.constant 0 : index
    %c0_19 = arith.constant 0 : index
    %21 = vector.load %arg8[%c0_18, %c0_19] : memref<8x1xf32, #tpu.memory_space<vmem>>, vector<8x1xf32>
    %22 = arith.mulf %4, %4 : vector<8x500xf32>
    %cst_20 = arith.constant dense<0.000000e+00> : vector<8xf32>
    %23 = vector.multi_reduction <add>, %22, %cst_20 [1] : vector<8x500xf32> to vector<8xf32>
    %24 = vector.shape_cast %23 : vector<8xf32> to vector<8x1xf32>
    %25 = arith.addf %21, %24 : vector<8x1xf32>
    %c0_21 = arith.constant 0 : index
    %c0_22 = arith.constant 0 : index
    %26 = vector.load %arg8[%c0_21, %c0_22] : memref<8x1xf32, #tpu.memory_space<vmem>>, vector<8x1xf32>
    tpu.vector_store %arg8[%c0_21, %c0_22], %25 {strides = array<i32>} : memref<8x1xf32, #tpu.memory_space<vmem>>, vector<8x1xf32>,
    %c0_23 = arith.constant 0 : index
    %c0_24 = arith.constant 0 : index
    %27 = vector.load %arg9[%c0_23, %c0_24] : memref<8x1xf32, #tpu.memory_space<vmem>>, vector<8x1xf32>
    %28 = arith.mulf %3, %4 : vector<8x500xf32>
    %cst_25 = arith.constant dense<0.000000e+00> : vector<8xf32>
    %29 = vector.multi_reduction <add>, %28, %cst_25 [1] : vector<8x500xf32> to vector<8xf32>
    %30 = vector.shape_cast %29 : vector<8xf32> to vector<8x1xf32>
    %31 = arith.addf %27, %30 : vector<8x1xf32>
    %c0_26 = arith.constant 0 : index
    %c0_27 = arith.constant 0 : index
    %32 = vector.load %arg9[%c0_26, %c0_27] : memref<8x1xf32, #tpu.memory_space<vmem>>, vector<8x1xf32>
    tpu.vector_store %arg9[%c0_26, %c0_27], %31 {strides = array<i32>} : memref<8x1xf32, #tpu.memory_space<vmem>>, vector<8x1xf32>,
    %c0_i32_28 = arith.constant 0 : i32
    %33 = arith.cmpi eq, %arg1, %c0_i32_28 : i32
    %34 = arith.extui %33 : i1 to i32
    %c0_i32_29 = arith.constant 0 : i32
    %35 = arith.cmpi ne, %34, %c0_i32_29 : i32
    scf.if %35 {
      %c0_30 = arith.constant 0 : index
      %c0_31 = arith.constant 0 : index
      %36 = vector.load %arg5[%c0_30, %c0_31] : memref<8x1xf32, #tpu.memory_space<vmem>>, vector<8x1xf32>
      %c0_32 = arith.constant 0 : index
      %c0_33 = arith.constant 0 : index
      %37 = vector.load %arg6[%c0_32, %c0_33] : memref<8x1xf32, #tpu.memory_space<vmem>>, vector<8x1xf32>
      %c0_34 = arith.constant 0 : index
      %c0_35 = arith.constant 0 : index
      %38 = vector.load %arg9[%c0_34, %c0_35] : memref<8x1xf32, #tpu.memory_space<vmem>>, vector<8x1xf32>
      %39 = arith.mulf %36, %37 : vector<8x1xf32>
      %cst_36 = arith.constant 2.000000e-03 : f32
      %40 = vector.broadcast %cst_36 : f32 to vector<8x1xf32>
      %41 = arith.mulf %39, %40 : vector<8x1xf32>
      %42 = arith.subf %38, %41 : vector<8x1xf32>
      %c0_37 = arith.constant 0 : index
      %c0_38 = arith.constant 0 : index
      %43 = vector.load %arg8[%c0_37, %c0_38] : memref<8x1xf32, #tpu.memory_space<vmem>>, vector<8x1xf32>
      %44 = arith.mulf %37, %37 : vector<8x1xf32>
      %cst_39 = arith.constant 2.000000e-03 : f32
      %45 = vector.broadcast %cst_39 : f32 to vector<8x1xf32>
      %46 = arith.mulf %44, %45 : vector<8x1xf32>
      %47 = arith.subf %43, %46 : vector<8x1xf32>
      %c0_40 = arith.constant 0 : index
      %c0_41 = arith.constant 0 : index
      %48 = vector.load %arg7[%c0_40, %c0_41] : memref<8x1xf32, #tpu.memory_space<vmem>>, vector<8x1xf32>
      %49 = arith.mulf %36, %36 : vector<8x1xf32>
      %cst_42 = arith.constant 2.000000e-03 : f32
      %50 = vector.broadcast %cst_42 : f32 to vector<8x1xf32>
      %51 = arith.mulf %49, %50 : vector<8x1xf32>
      %52 = arith.subf %48, %51 : vector<8x1xf32>
      %cst_43 = arith.constant 1.1920929E-7 : f32
      %53 = vector.broadcast %cst_43 : f32 to vector<8x1xf32>
      %54 = arith.addf %42, %53 : vector<8x1xf32>
      %cst_44 = arith.constant 1.1920929E-7 : f32
      %55 = vector.broadcast %cst_44 : f32 to vector<8x1xf32>
      %56 = arith.addf %47, %55 : vector<8x1xf32>
      %57 = arith.divf %54, %56 : vector<8x1xf32>
      %58 = arith.mulf %57, %57 : vector<8x1xf32>
      %59 = arith.mulf %58, %47 : vector<8x1xf32>
      %cst_45 = arith.constant 2.000000e+00 : f32
      %60 = vector.broadcast %cst_45 : f32 to vector<8x1xf32>
      %61 = arith.mulf %60, %57 : vector<8x1xf32>
      %62 = arith.mulf %61, %42 : vector<8x1xf32>
      %63 = arith.subf %52, %62 : vector<8x1xf32>
      %64 = arith.addf %63, %59 : vector<8x1xf32>
      %cst_46 = arith.constant 0.000000e+00 : f32
      %65 = vector.broadcast %cst_46 : f32 to vector<8x1xf32>
      %66 = arith.maximumf %64, %65 : vector<8x1xf32>
      %cst_47 = arith.constant 1.1920929E-7 : f32
      %67 = vector.broadcast %cst_47 : f32 to vector<8x1xf32>
      %68 = arith.addf %59, %67 : vector<8x1xf32>
      %cst_48 = arith.constant 1.1920929E-7 : f32
      %69 = vector.broadcast %cst_48 : f32 to vector<8x1xf32>
      %70 = arith.addf %66, %69 : vector<8x1xf32>
      %71 = arith.divf %68, %70 : vector<8x1xf32>
      %72 = math.log %71 : vector<8x1xf32>
      %cst_49 = arith.constant 0.434294492 : f32
      %73 = vector.broadcast %cst_49 : f32 to vector<8x1xf32>
      %74 = arith.mulf %72, %73 : vector<8x1xf32>
      %cst_50 = arith.constant 1.000000e+01 : f32
      %75 = vector.broadcast %cst_50 : f32 to vector<8x1xf32>
      %76 = arith.mulf %75, %74 : vector<8x1xf32>
      %c0_51 = arith.constant 0 : index
      %c0_52 = arith.constant 0 : index
      %77 = vector.load %arg4[%c0_51, %c0_52] : memref<8x1xf32, #tpu.memory_space<vmem>>, vector<8x1xf32>
      tpu.vector_store %arg4[%c0_51, %c0_52], %76 {strides = array<i32>} : memref<8x1xf32, #tpu.memory_space<vmem>>, vector<8x1xf32>,
    } else {
    }
    return
  }
  func.func @transform_0(%arg0: i32, %arg1: i32) -> (i32, i32) {
    %c0_i32 = arith.constant 0 : i32
    return %arg0, %arg1 : i32, i32
  }
  func.func @transform_1(%arg0: i32, %arg1: i32) -> (i32, i32) {
    %c0_i32 = arith.constant 0 : i32
    return %arg0, %arg1 : i32, i32
  }
  func.func @transform_2(%arg0: i32, %arg1: i32) -> (i32, i32) {
    %c0_i32 = arith.constant 0 : i32
    %c0_i32_0 = arith.constant 0 : i32
    return %arg0, %c0_i32 : i32, i32
  }
}

</mosaic_0001>

<llo_original>
// kernel: tpu_custom_call.1
$region0: #{tpu_custom_call.1}
  #allocation0 [shape = 'u32[]', space=smem, size = 0x4, offset = 0x4, fixed_abs, tag = 'smem constant byte address 0x4 - core index']
  #allocation1 [shape = 'u32[144,128]{1,0:T(1,128)}', space=vmem, size = 0x12000, scoped, tag = 'internal scratch']
  #allocation2 [shape = 'f32[8,1]{1,0:T(8,128)}', space=vmem, size = 0x1000, scoped, tag = 'scratch operand']
  #allocation3 [shape = 'f32[8,1]{1,0:T(8,128)}', space=vmem, size = 0x1000, scoped, tag = 'scratch operand']
  #allocation4 [shape = 'f32[8,1]{1,0:T(8,128)}', space=vmem, size = 0x1000, scoped, tag = 'scratch operand']
  #allocation5 [shape = 'f32[8,1]{1,0:T(8,128)}', space=vmem, size = 0x1000, scoped, tag = 'scratch operand']
  #allocation6 [shape = 'f32[8,1]{1,0:T(8,128)}', space=vmem, size = 0x1000, scoped, tag = 'scratch operand']
  %s0 = inlined_call_operand.hbm [shape: f32[10,500], index: 0, kind: input, shape index: {}]
  %s1 = inlined_call_operand.hbm [shape: f32[10,500], index: 1, kind: input, shape index: {}]
  %s2 = inlined_call_operand.vmem [shape: f32[10,1], index: 2, kind: output, shape index: {}]
  %s3 = sld [smem:[#allocation0]]
  $region57: #{tpu_custom_call.1} parent=0
    _
  %s5 = ssub.s32 1, %s3
  %s6 = scalar_select 0, %s5, %s3
  $region1: #{tpu_custom_call.1} parent=0
    #allocation7 [shape = 'u8[32768]{0}', space=vmem, size = 0x8000, scoped, tag = 'input window, operand 0']
    #allocation8 [shape = 's32[2]{0}', space=sflag, size = 0x8, scoped, tag = 'scoped memory for tpu_custom_call.1']
    #allocation9 [shape = 'u8[32768]{0}', space=vmem, size = 0x8000, scoped, tag = 'input window, operand 1']
    #allocation10 [shape = 's32[2]{0}', space=sflag, size = 0x8, scoped, tag = 'scoped memory for tpu_custom_call.1']
    %7 = vsyncpa [#allocation8], 0
    %s8 = scalar_lea.sflag [#allocation8], 1
    %9 = vsyncpa %s8, 0
    %10 = vsyncpa [#allocation10], 0
    %s11 = scalar_lea.sflag [#allocation10], 1
    %12 = vsyncpa %s11, 0
    loop: start=0, step=1, limit=4
    $region2: #{tpu_custom_call.1} parent=1 // loop_pre_header
      _
    $region3: #{tpu_custom_call.1} parent=1 // loop_header
      %s14 = sphi 0, %s18
      %p15 = scmp.ge.s32.totalorder %s14, 4
      %s21 = sphi 0, %s33
      %s22 = sphi 0, %s29
      %s23 = sphi 0, %s21
      %s24 = sphi 0, %s22
      %s25 = sphi 0, %s23
      %s26 = sphi 0, %s24
      %s38 = sphi 0, %s40
      %s41 = sphi 0, %s38
      %s42 = sphi 0, %s41
      %s58 = sphi 0, %s42
      %s66 = sphi 0, %s68
      %s69 = sphi 0, %s66
      %s70 = sphi 0, %s69
      %s86 = sphi 0, %s70
      %s92 = sphi 0, %s94
      %s95 = sphi 0, %s92
      %s96 = sphi 0, %s95
      %s112 = sphi 0, %s96
    $region4: #{tpu_custom_call.1} parent=1 // loop_header_branch
      %17 = sbr.rel (%p15) target = $region8
    $region5: #{tpu_custom_call.1} parent=1 // loop_body
      %s19 = ssub.s32 %s14, 1
      %s20 = ssub.s32 %s14, 2
      %s27 = sadd.s32 1, %s22
      %p28 = scmp.ge.s32.totalorder %s27, 1
      %s29 = scalar_select %p28, 0, %s27
      %s30 = sadd.s32 1, %s21
      %s31 = scalar_select %p28, %s30, %s21
      %p32 = scmp.ge.s32.totalorder %s31, 2
      %s33 = scalar_select %p32, 0, %s31
      %s34 = ssub.s32 %s21, %s33
      %s35 = ssub.s32 %s22, %s29
      %s36 = sor.u32 %s34, %s35
      %p37 = scmp.eq.s32.totalorder %s36, 0
      %s39 = sadd.s32 %s38, 1
      %s40 = scalar_select %p37, %s38, %s39
      %p43 = pneg %p37
      %p44 = scmp.eq.s32.totalorder %s14, 1
      %p45 = por %p43, %p44
      %p46 = scmp.ne.s32.totalorder %s38, %s41
      %p47 = scmp.eq.s32.totalorder %s14, 0
      %p48 = por %p46, %p47
      %p49 = scmp.ne.s32.totalorder %s38, %s41
      %p50 = scmp.eq.s32.totalorder %s19, 1
      %p51 = por %p49, %p50
      %p52 = scmp.ne.s32.totalorder %s41, %s42
      %p53 = scmp.eq.s32.totalorder %s19, 0
      %p54 = por %p52, %p53
      %p55 = scmp.ne.s32.totalorder %s41, %s42
      %p56 = scmp.eq.s32.totalorder %s20, 1
      %p57 = por %p55, %p56
      %p59 = scmp.ne.s32.totalorder %s42, %s58
      %p60 = scmp.eq.s32.totalorder %s20, 0
      %p61 = por %p59, %p60
      %s62 = ssub.s32 %s21, %s33
      %s63 = ssub.s32 %s22, %s29
      %s64 = sor.u32 %s62, %s63
      %p65 = scmp.eq.s32.totalorder %s64, 0
      %s67 = sadd.s32 %s66, 1
      %s68 = scalar_select %p65, %s66, %s67
      %p71 = pneg %p65
      %p72 = scmp.eq.s32.totalorder %s14, 1
      %p73 = por %p71, %p72
      %p74 = scmp.ne.s32.totalorder %s66, %s69
      %p75 = scmp.eq.s32.totalorder %s14, 0
      %p76 = por %p74, %p75
      %p77 = scmp.ne.s32.totalorder %s66, %s69
      %p78 = scmp.eq.s32.totalorder %s19, 1
      %p79 = por %p77, %p78
      %p80 = scmp.ne.s32.totalorder %s69, %s70
      %p81 = scmp.eq.s32.totalorder %s19, 0
      %p82 = por %p80, %p81
      %p83 = scmp.ne.s32.totalorder %s69, %s70
      %p84 = scmp.eq.s32.totalorder %s20, 1
      %p85 = por %p83, %p84
      %p87 = scmp.ne.s32.totalorder %s70, %s86
      %p88 = scmp.eq.s32.totalorder %s20, 0
      %p89 = por %p87, %p88
      %s90 = ssub.s32 %s21, %s33
      %p91 = scmp.eq.s32.totalorder %s90, 0
      %s93 = sadd.s32 %s92, 1
      %s94 = scalar_select %p91, %s92, %s93
      %p97 = pneg %p91
      %p98 = scmp.eq.s32.totalorder %s14, 1
      %p99 = por %p97, %p98
      %p100 = scmp.ne.s32.totalorder %s92, %s95
      %p101 = scmp.eq.s32.totalorder %s14, 0
      %p102 = por %p100, %p101
      %p103 = scmp.ne.s32.totalorder %s92, %s95
      %p104 = scmp.eq.s32.totalorder %s19, 1
      %p105 = por %p103, %p104
      %p106 = scmp.ne.s32.totalorder %s95, %s96
      %p107 = scmp.eq.s32.totalorder %s19, 0
      %p108 = por %p106, %p107
      %p109 = scmp.ne.s32.totalorder %s95, %s96
      %p110 = scmp.eq.s32.totalorder %s20, 1
      %p111 = por %p109, %p110
      %p113 = scmp.ne.s32.totalorder %s96, %s112
      %p114 = scmp.eq.s32.totalorder %s20, 0
      %p115 = por %p113, %p114
      %p116 = scmp.le.s32.totalorder 1, %s14
      %p117 = scmp.lt.s32.totalorder %s14, 3
      %p118 = pnand %p116, %p117
      %p119 = pneg %p118
      // Predicated region
      $region9: #{tpu_custom_call.1} parent=5 // pred_check
        _
      $region10: #{tpu_custom_call.1} parent=5 // pred_check_branch
        %121 = sbr.rel (%p118) target = $region12
      $region11: #{tpu_custom_call.1} parent=5 // pred_region
        %s122 = ssub.s32 %s14, 1
      $region12: #{tpu_custom_call.1} parent=5 // pred_fallthru
        _
      %p123 = scmp.lt.s32.totalorder %s14, 2
      // Predicated region
      $region13: #{tpu_custom_call.1} parent=5 // pred_check
        %p124 = pneg %p123
      $region14: #{tpu_custom_call.1} parent=5 // pred_check_branch
        %126 = sbr.rel (%p124) target = $region16
      $region15: #{tpu_custom_call.1} parent=5 // pred_region
        // Predicated region
        $region17: #{tpu_custom_call.1} parent=15 // pred_check
          %p127 = pneg %p48
        $region18: #{tpu_custom_call.1} parent=15 // pred_check_branch
          %129 = sbr.rel (%p127) target = $region20
        $region19: #{tpu_custom_call.1} parent=15 // pred_region
          %s130 = sand.u32 %s38, 1
          %s131 = scalar_lea.sflag [#allocation8], %s130
          %s132 = sand.u32 %s38, 1
          %s133 = smul.addr %s132, 32
          %s134 = scalar_lea.vmem [#allocation7], %s133
          %s135 = smul.u32 4, %s22
          %s137 = ssub.s32 512, 512
          %138 = vsyncadd %s131, %s137
          %s139 = smul.addr %s21, 4
          %s140 = sadd.s32 %s135, %s139
          %s141 = smul.addr %s140, 128
          %s142 = scalar_lea.hbm %s0, %s141
          %s144 = sshll.u32 %s134, 4
          %s145 = int_to_ptr.vmem [resolvable:$true] %s144
          %147 = dma.hbm_to_vmem [thread:$0]  %s142, 512, %s145, %s131
        $region20: #{tpu_custom_call.1} parent=15 // pred_fallthru
          _
        // Predicated region
        $region21: #{tpu_custom_call.1} parent=15 // pred_check
          %p148 = pneg %p76
        $region22: #{tpu_custom_call.1} parent=15 // pred_check_branch
          %150 = sbr.rel (%p148) target = $region24
        $region23: #{tpu_custom_call.1} parent=15 // pred_region
          %s151 = sand.u32 %s66, 1
          %s152 = scalar_lea.sflag [#allocation10], %s151
          %s153 = sand.u32 %s66, 1
          %s154 = smul.addr %s153, 32
          %s155 = scalar_lea.vmem [#allocation9], %s154
          %s156 = smul.u32 4, %s22
          %s158 = ssub.s32 512, 512
          %159 = vsyncadd %s152, %s158
          %s160 = smul.addr %s21, 4
          %s161 = sadd.s32 %s156, %s160
          %s162 = smul.addr %s161, 128
          %s163 = scalar_lea.hbm %s1, %s162
          %s165 = sshll.u32 %s155, 4
          %s166 = int_to_ptr.vmem [resolvable:$true] %s165
          %168 = dma.hbm_to_vmem [thread:$0]  %s163, 512, %s166, %s152
        $region24: #{tpu_custom_call.1} parent=15 // pred_fallthru
          _
      $region16: #{tpu_custom_call.1} parent=5 // pred_fallthru
        _
      %p169 = scmp.le.s32.totalorder 1, %s14
      %p170 = scmp.lt.s32.totalorder %s14, 3
      %p171 = pnand %p169, %p170
      %p172 = pneg %p171
      // Predicated region
      $region25: #{tpu_custom_call.1} parent=5 // pred_check
        _
      $region26: #{tpu_custom_call.1} parent=5 // pred_check_branch
        %174 = sbr.rel (%p171) target = $region28
      $region27: #{tpu_custom_call.1} parent=5 // pred_region
        %s175 = ssub.s32 %s14, 1
        %s176 = sand.u32 %s41, 1
        %s177 = scalar_lea.sflag [#allocation8], %s176
        %s178 = sand.u32 %s41, 1
        %s179 = smul.addr %s178, 32
        %s180 = scalar_lea.vmem [#allocation7], %s179
        // Predicated region
        $region29: #{tpu_custom_call.1} parent=27 // pred_check
          %p181 = pneg %p54
        $region30: #{tpu_custom_call.1} parent=27 // pred_check_branch
          %183 = sbr.rel (%p181) target = $region32
        $region31: #{tpu_custom_call.1} parent=27 // pred_region
          %184 = dma.done %s177, 512
        $region32: #{tpu_custom_call.1} parent=27 // pred_fallthru
          _
        %s185 = sand.u32 %s69, 1
        %s186 = scalar_lea.sflag [#allocation10], %s185
        %s187 = sand.u32 %s69, 1
        %s188 = smul.addr %s187, 32
        %s189 = scalar_lea.vmem [#allocation9], %s188
        // Predicated region
        $region33: #{tpu_custom_call.1} parent=27 // pred_check
          %p190 = pneg %p82
        $region34: #{tpu_custom_call.1} parent=27 // pred_check_branch
          %192 = sbr.rel (%p190) target = $region36
        $region35: #{tpu_custom_call.1} parent=27 // pred_region
          %193 = dma.done %s186, 512
        $region36: #{tpu_custom_call.1} parent=27 // pred_fallthru
          _
        %s194 = sand.u32 %s41, 1
        %s195 = scalar_lea.sflag [#allocation8], %s194
        %s196 = sand.u32 %s41, 1
        %s197 = smul.addr %s196, 32
        %s198 = scalar_lea.vmem [#allocation7], %s197
        %p199 = pneg %p54
        %p200 = pneg %p51
        %s201 = sand.u32 %s69, 1
        %s202 = scalar_lea.sflag [#allocation10], %s201
        %s203 = sand.u32 %s69, 1
        %s204 = smul.addr %s203, 32
        %s205 = scalar_lea.vmem [#allocation9], %s204
        %p206 = pneg %p82
        %p207 = pneg %p79
        %p208 = pneg %p108
        %p209 = pneg %p105
        %p210 = scmp.lt.s32.totalorder %s23, 1
        %s211 = scalar_select %p210, %s23, 1
        %s212 = smul.addr %s211, 8
        %s213 = scalar_lea.vmem %s2, %s212
        %s214 = smul.u32 4, %s24
        %s215 = smul.u32 4, %s24
        %p216 = scmp.lt.s32.totalorder %s23, 1
        %s217 = scalar_select %p216, %s23, 1
        %s218 = smul.addr %s217, 8
        %s219 = scalar_lea.vmem %s2, %s218
        %p220 = scmp.eq.s32.totalorder %s24, 0
        // Predicated region
        $region37: #{tpu_custom_call.1} parent=27 // pred_check
          %p221 = pneg %p220
        $region38: #{tpu_custom_call.1} parent=27 // pred_check_branch
          %223 = sbr.rel (%p221) target = $region40
        $region39: #{tpu_custom_call.1} parent=27 // pred_region
          %vm224 = vcmask 7168
          %225 = vst.msk [vmem:[#allocation2] sm:$0xff] %vm224, 0.0
          %226 = vst.msk [vmem:[#allocation3] sm:$0xff] %vm224, 0.0
          %227 = vst.msk [vmem:[#allocation4] sm:$0xff] %vm224, 0.0
          %228 = vst.msk [vmem:[#allocation5] sm:$0xff] %vm224, 0.0
          %229 = vst.msk [vmem:[#allocation6] sm:$0xff] %vm224, 0.0
        $region40: #{tpu_custom_call.1} parent=27 // pred_fallthru
          _
        %v230 = vld [vmem:[%s180] sm:$0xff]
        %v231 = vld [vmem:[%s180 + $0x8] sm:$0xff]
        %v232 = vld [vmem:[%s180 + $0x10] sm:$0xff]
        %v233 = vld [vmem:[%s180 + $0x18] sm:$0xff]
        %v234 = vld [vmem:[%s189] sm:$0xff]
        %v235 = vld [vmem:[%s189 + $0x8] sm:$0xff]
        %v236 = vld [vmem:[%s189 + $0x10] sm:$0xff]
        %v237 = vld [vmem:[%s189 + $0x18] sm:$0xff]
        %v238 = vld [vmem:[#allocation2] sm:$0xff]
        %v239 = vadd.f32 %v230, %v231
        %v240 = vadd.f32 %v239, %v232
        %vm241 = vcmask 949248
        %v242 = vsel %vm241, %v233, 0.0
        %v243 = vadd.f32 %v240, %v242
        %244 = vadd.xlane.f32.xlu0 %v243
        %v245 = vpop.xlane.xlu0 %244
        %v246 = vadd.f32 %v238, %v245
        %vm247 = vcmask 7168
        %248 = vst.msk [vmem:[#allocation2] sm:$0xff] %vm247, %v246
        %v249 = vld [vmem:[#allocation3] sm:$0xff]
        %v250 = vadd.f32 %v234, %v235
        %v251 = vadd.f32 %v250, %v236
        %v252 = vsel %vm241, %v237, 0.0
        %v253 = vadd.f32 %v251, %v252
        %254 = vadd.xlane.f32.xlu0 %v253
        %v255 = vpop.xlane.xlu0 %254
        %v256 = vadd.f32 %v249, %v255
        %257 = vst.msk [vmem:[#allocation3] sm:$0xff] %vm247, %v256
        %v258 = vld [vmem:[#allocation4] sm:$0xff]
        %v259 = vmul.f32 %v230, %v230
        %v260 = vmul.f32 %v231, %v231
        %v261 = vmul.f32 %v232, %v232
        %v262 = vmul.f32 %v233, %v233
        %v263 = vadd.f32 %v259, %v260
        %v264 = vadd.f32 %v263, %v261
        %v265 = vsel %vm241, %v262, 0.0
        %v266 = vadd.f32 %v264, %v265
        %267 = vadd.xlane.f32.xlu0 %v266
        %v268 = vpop.xlane.xlu0 %267
        %v269 = vadd.f32 %v258, %v268
        %270 = vst.msk [vmem:[#allocation4] sm:$0xff] %vm247, %v269
        %v271 = vld [vmem:[#allocation5] sm:$0xff]
        %v272 = vmul.f32 %v234, %v234
        %v273 = vmul.f32 %v235, %v235
        %v274 = vmul.f32 %v236, %v236
        %v275 = vmul.f32 %v237, %v237
        %v276 = vadd.f32 %v272, %v273
        %v277 = vadd.f32 %v276, %v274
        %v278 = vsel %vm241, %v275, 0.0
        %v279 = vadd.f32 %v277, %v278
        %280 = vadd.xlane.f32.xlu0 %v279
        %v281 = vpop.xlane.xlu0 %280
        %v282 = vadd.f32 %v271, %v281
        %283 = vst.msk [vmem:[#allocation5] sm:$0xff] %vm247, %v282
        %v284 = vld [vmem:[#allocation6] sm:$0xff]
        %v285 = vmul.f32 %v230, %v234
        %v286 = vmul.f32 %v231, %v235
        %v287 = vmul.f32 %v232, %v236
        %v288 = vmul.f32 %v233, %v237
        %v289 = vadd.f32 %v285, %v286
        %v290 = vadd.f32 %v289, %v287
        %v291 = vsel %vm241, %v288, 0.0
        %v292 = vadd.f32 %v290, %v291
        %293 = vadd.xlane.f32.xlu0 %v292
        %v294 = vpop.xlane.xlu0 %293
        %v295 = vadd.f32 %v284, %v294
        %296 = vst.msk [vmem:[#allocation6] sm:$0xff] %vm247, %v295
        // Predicated region
        $region41: #{tpu_custom_call.1} parent=27 // pred_check
          %p297 = pneg %p220
        $region42: #{tpu_custom_call.1} parent=27 // pred_check_branch
          %299 = sbr.rel (%p297) target = $region44
        $region43: #{tpu_custom_call.1} parent=27 // pred_region
          %v300 = vld [vmem:[#allocation2] sm:$0xff]
          %v301 = vld [vmem:[#allocation3] sm:$0xff]
          %v302 = vld [vmem:[#allocation6] sm:$0xff]
          %v303 = vmul.f32 %v300, %v301
          %v304 = vmul.f32 %v303, 0.002
          %v305 = vsub.f32 %v302, %v304
          %v306 = vld [vmem:[#allocation5] sm:$0xff]
          %v307 = vmul.f32 %v301, %v301
          %v308 = vmul.f32 %v307, 0.002
          %v309 = vsub.f32 %v306, %v308
          %v310 = vld [vmem:[#allocation4] sm:$0xff]
          %v311 = vmul.f32 %v300, %v300
          %v312 = vmul.f32 %v311, 0.002
          %v313 = vsub.f32 %v310, %v312
          %v314 = vadd.f32 %v305, 1.1920929e-07
          %v315 = vadd.f32 %v309, 1.1920929e-07
          %v316 = vrcp.pop %v315
          %v317 = vmul.f32 %v314, %v316
          %v318 = vmul.f32 %v317, %v317
          %v319 = vmul.f32 %v318, %v309
          %v320 = vmul.f32 %v317, 2.0
          %v321 = vmul.f32 %v320, %v305
          %v322 = vsub.f32 %v313, %v321
          %v323 = vadd.f32 %v322, %v319
          %v324 = vmax.f32 %v323, 0.0
          %v325 = vadd.f32 %v319, 1.1920929e-07
          %v326 = vadd.f32 %v324, 1.1920929e-07
          %v327 = vrcp.pop %v326
          %v328 = vmul.f32 %v325, %v327
          %v329 = vlog2.pop %v328
          %v330 = vmul.f32 %v329, 0.6931472
          %v331 = vmul.f32 %v330, 0.4342945
          %v332 = vmul.f32 %v331, 10.0
          %333 = vst.msk [vmem:[%s219] sm:$0xff] %vm247, %v332
        $region44: #{tpu_custom_call.1} parent=27 // pred_fallthru
          _
        %p334 = scmp.lt.s32.totalorder %s23, 1
        %s335 = scalar_select %p334, %s23, 1
        %s336 = smul.addr %s335, 8
        %s337 = scalar_lea.vmem %s2, %s336
        // Predicated region
        $region45: #{tpu_custom_call.1} parent=27 // pred_check
          %p338 = pneg %p105
        $region46: #{tpu_custom_call.1} parent=27 // pred_check_branch
          %340 = sbr.rel (%p338) target = $region48
        $region47: #{tpu_custom_call.1} parent=27 // pred_region
          _
        $region48: #{tpu_custom_call.1} parent=27 // pred_fallthru
          _
      $region28: #{tpu_custom_call.1} parent=5 // pred_fallthru
        _
      %p341 = scmp.le.s32.totalorder 2, %s14
      // Predicated region
      $region49: #{tpu_custom_call.1} parent=5 // pred_check
        %p342 = pneg %p341
      $region50: #{tpu_custom_call.1} parent=5 // pred_check_branch
        %344 = sbr.rel (%p342) target = $region52
      $region51: #{tpu_custom_call.1} parent=5 // pred_region
        %s345 = ssub.s32 %s14, 2
        // Predicated region
        $region53: #{tpu_custom_call.1} parent=51 // pred_check
          %p346 = pneg %p111
        $region54: #{tpu_custom_call.1} parent=51 // pred_check_branch
          %348 = sbr.rel (%p346) target = $region56
        $region55: #{tpu_custom_call.1} parent=51 // pred_region
          %p349 = scmp.lt.s32.totalorder %s25, 1
          %s350 = scalar_select %p349, %s25, 1
          %s351 = smul.addr %s350, 8
          %s352 = scalar_lea.vmem %s2, %s351
        $region56: #{tpu_custom_call.1} parent=51 // pred_fallthru
          _
      $region52: #{tpu_custom_call.1} parent=5 // pred_fallthru
        _
    $region6: #{tpu_custom_call.1} parent=1 // loop_footer
      %s18 = sadd.s32 1, %s14
    $region7: #{tpu_custom_call.1} parent=1 // loop_footer_branch
      %13 = sbr.rel target = $region3
    $region8: #{tpu_custom_call.1} parent=1 // loop_exit
      _
    %353 = vsyncpa [#allocation8], 1
    %s354 = scalar_lea.sflag [#allocation8], 1
    %355 = vsyncpa %s354, 1
    %356 = vsyncpa [#allocation10], 1
    %s357 = scalar_lea.sflag [#allocation10], 1
    %358 = vsyncpa %s357, 1

</llo_original>
